<compile_context>
chip_gen: v5e
topology: v5e:2x2
jax: 0.10.0
libtpu: 0.0.40
codegen_flags: <defaults>
</compile_context>

<pallas_src>
import functools

import numpy as np
import jax
import jax.numpy as jnp
from jax.experimental import pallas as pl
from jax.experimental.pallas import tpu as pltpu

N_LAYERS = 5
BLOCK_DIMS = [(64, 128), (128, 256), (256, 400), (400, 400), (400, 400)]
ADAPTER_OUT = [64, 128, 256, 400, 400]

MAX_TM = 256  # row tile for the adapter (1x1 conv) matmul kernel


def _pad128(c):
    return ((c + 127) // 128) * 128


# ----------------------------------------------------------------------------
# Generic row-tiled matmul (+bias, optional LeakyReLU) -- used for 1x1 adapters
# ----------------------------------------------------------------------------
def _matmul_bias_act_kernel(x_ref, w_ref, b_ref, o_ref, *, act):
    y = jnp.dot(x_ref[...], w_ref[...], preferred_element_type=jnp.float32)
    y = y + b_ref[...]
    if act:
        y = jnp.where(y > 0, y, 0.2 * y)
    o_ref[...] = y.astype(o_ref.dtype)


def matmul_bias_act(x, w, b, act, out_dtype=jnp.bfloat16):
    """x:(M,K) @ w:(K,N) + b:(N,), optional LeakyReLU(0.2).  Row tiles <= 256,
    pl.cdiv grid (boundary block masked by Pallas -- no whole-tensor pad)."""
    M, K = x.shape
    Nc = w.shape[1]
    tm = min(MAX_TM, ((M + 7) // 8) * 8)
    return pl.pallas_call(
        functools.partial(_matmul_bias_act_kernel, act=act),
        out_shape=jax.ShapeDtypeStruct((M, Nc), out_dtype),
        grid=(pl.cdiv(M, tm),),
        in_specs=[
            pl.BlockSpec((tm, K), lambda i: (i, 0)),
            pl.BlockSpec((K, Nc), lambda i: (0, 0)),
            pl.BlockSpec((1, Nc), lambda i: (0, 0)),
        ],
        out_specs=pl.BlockSpec((tm, Nc), lambda i: (i, 0)),
        compiler_params=pltpu.CompilerParams(dimension_semantics=("parallel",)),
    )(x, w, b.reshape(1, Nc))


# ----------------------------------------------------------------------------
# Fused 3x3 CoordConv kernels (im2col-free; coord channels folded into a bias
# map; second conv also fuses 1x1 residual + add + LeakyReLU + AvgPool2d(2))
# ----------------------------------------------------------------------------
def _row_index_map(k):
    def idx(n, r):
        return (n, 2 * r + k, 0, 0)
    return idx


def _halo_row_specs(wp2, c):
    # 4 single padded rows: rows 2r .. 2r+3 of the zero-padded input feed the
    # two conv-output rows 2r, 2r+1 handled by this grid step.
    return [pl.BlockSpec((1, 1, wp2, c), _row_index_map(k)) for k in range(4)]


def _coordconv_leaky_kernel(r0_ref, r1_ref, r2_ref, r3_ref, w_ref, b_ref, o_ref):
    """y = LeakyReLU_0.2(conv3x3(x_pad) + bias_map) for one output-row pair."""
    wp2 = r0_ref.shape[2]
    W = wp2 - 2
    rows = (r0_ref[0, 0], r1_ref[0, 0], r2_ref[0, 0], r3_ref[0, 0])  # (W+2, Cin)
    for local in range(2):
        # lanes ordered (di, cin) to match the weight slab layout
        lhs = jnp.concatenate([rows[local], rows[local + 1], rows[local + 2]],
                              axis=-1)                               # (W+2, 3*Cin)
        acc = b_ref[local]                                           # (W, Cout) f32
        for dj in range(3):
            prod = jnp.dot(lhs, w_ref[dj], preferred_element_type=jnp.float32)
            acc = acc + prod[dj:dj + W]
        y = jnp.where(acc > 0, acc, 0.2 * acc)
        o_ref[0, local] = y.astype(o_ref.dtype)


def _coordconv_res_pool_kernel(r0_ref, r1_ref, r2_ref, r3_ref, x_ref, w_ref,
                               rw_ref, b_ref, pool_ref, o_ref):
    """pooled = avgpool2x2(LeakyReLU_0.2(conv3x3(h1_pad) + x@res_w + bias_map))."""
    wp2 = r0_ref.shape[2]
    W = wp2 - 2
    rows = (r0_ref[0, 0], r1_ref[0, 0], r2_ref[0, 0], r3_ref[0, 0])
    ys = []
    for local in range(2):
        lhs = jnp.concatenate([rows[local], rows[local + 1], rows[local + 2]],
                              axis=-1)
        acc = b_ref[local] + jnp.dot(x_ref[0, local], rw_ref[...],
                                     preferred_element_type=jnp.float32)
        for dj in range(3):
            prod = jnp.dot(lhs, w_ref[dj], preferred_element_type=jnp.float32)
            acc = acc + prod[dj:dj + W]
        ys.append(jnp.where(acc > 0, acc, 0.2 * acc))
    # 2x2 average pool: rows pooled by the (y0 + y1) sum, columns by the
    # constant 0.25 selection matrix (one tiny MXU dot, no sublane shuffles).
    pooled = jnp.dot(pool_ref[...], ys[0] + ys[1],
                     preferred_element_type=jnp.float32)             # (Wo, Cout)
    o_ref[0, 0] = pooled.astype(o_ref.dtype)


def _coord_bias_map(H, W, wxx, wyy, b):
    """Conv contribution of the AddCoords xx/yy channels + conv bias, (H,W,Cout)."""
    cout = wxx.shape[-1]
    xs = 2.0 * jnp.arange(H, dtype=jnp.float32) / (H - 1) - 1.0   # varies along H
    ys = 2.0 * jnp.arange(W, dtype=jnp.float32) / (W - 1) - 1.0   # varies along W
    xxp = jnp.pad(jnp.broadcast_to(xs[:, None], (H, W)), 1)
    yyp = jnp.pad(jnp.broadcast_to(ys[None, :], (H, W)), 1)
    acc = jnp.broadcast_to(b, (H, W, cout))
    for di in range(3):
        for dj in range(3):
            acc = acc + (xxp[di:di + H, dj:dj + W, None] * wxx[di, dj]
                         + yyp[di:di + H, dj:dj + W, None] * wyy[di, dj])
    return acc


def _pool_matrix(W):
    Wo = W // 2
    a = np.zeros((Wo, W), np.float32)
    for k in range(Wo):
        a[k, 2 * k] = 0.25
        a[k, 2 * k + 1] = 0.25
    return jnp.asarray(a)


def coordconv3x3_leaky(x, conv_p, cout_p):
    """CoordConv(3x3, pad=1) -> LeakyReLU(0.2).  x: (N,H,W,Cin_p) bf16."""
    N, H, W, cin_p = x.shape
    x_pad = jnp.pad(x, ((0, 0), (1, 1), (1, 1), (0, 0)))
    bias_map = _coord_bias_map(H, W, conv_p["wxx"], conv_p["wyy"], conv_p["b"])
    return pl.pallas_call(
        _coordconv_leaky_kernel,
        out_shape=jax.ShapeDtypeStruct((N, H, W, cout_p), jnp.bfloat16),
        grid=(N, H // 2),
        in_specs=_halo_row_specs(W + 2, cin_p) + [
            pl.BlockSpec((3, 3 * cin_p, cout_p), lambda n, r: (0, 0, 0)),
            pl.BlockSpec((2, W, cout_p), lambda n, r: (r, 0, 0)),
        ],
        out_specs=pl.BlockSpec((1, 2, W, cout_p), lambda n, r: (n, r, 0, 0)),
        compiler_params=pltpu.CompilerParams(
            dimension_semantics=("parallel", "parallel")),
    )(x_pad, x_pad, x_pad, x_pad, conv_p["w"], bias_map)


def coordconv3x3_res_pool(h1, x, blk, cout_p):
    """CoordConv(3x3) + 1x1 residual + add + LeakyReLU(0.2) + AvgPool2d(2)."""
    N, H, W, cin_p = x.shape
    c1p = h1.shape[3]
    h1_pad = jnp.pad(h1, ((0, 0), (1, 1), (1, 1), (0, 0)))
    conv2 = blk["conv2"]
    bias_map = (_coord_bias_map(H, W, conv2["wxx"], conv2["wyy"], conv2["b"])
                + blk["res_b"])
    pool = _pool_matrix(W)
    Ho, Wo = H // 2, W // 2
    return pl.pallas_call(
        _coordconv_res_pool_kernel,
        out_shape=jax.ShapeDtypeStruct((N, Ho, Wo, cout_p), jnp.bfloat16),
        grid=(N, Ho),
        in_specs=_halo_row_specs(W + 2, c1p) + [
            pl.BlockSpec((1, 2, W, cin_p), lambda n, r: (n, r, 0, 0)),   # x rows
            pl.BlockSpec((3, 3 * c1p, cout_p), lambda n, r: (0, 0, 0)),  # conv2 w
            pl.BlockSpec((cin_p, cout_p), lambda n, r: (0, 0)),          # res_w
            pl.BlockSpec((2, W, cout_p), lambda n, r: (r, 0, 0)),        # bias map
            pl.BlockSpec((Wo, W), lambda n, r: (0, 0)),                  # pool mat
        ],
        out_specs=pl.BlockSpec((1, 1, Wo, cout_p), lambda n, r: (n, r, 0, 0)),
        compiler_params=pltpu.CompilerParams(
            dimension_semantics=("parallel", "parallel")),
    )(h1_pad, h1_pad, h1_pad, h1_pad, x, conv2["w"], blk["res_w"], bias_map, pool)


# ----------------------------------------------------------------------------
# Module forward passes
# ----------------------------------------------------------------------------
def downsample_resblock(x, blk):
    cout_p = blk["cout_p"]
    h1 = coordconv3x3_leaky(x, blk["conv1"], cout_p)        # CoordConv -> LeakyReLU
    return coordconv3x3_res_pool(h1, x, blk, cout_p)        # rest of block, fused


def adapter_forward(x, adapter):
    """1x1 conv (3 -> Cout) + LeakyReLU(0.2) as a row-tiled Pallas matmul."""
    N, H, W, _ = x.shape
    cout_p = adapter["w"].shape[1]
    y = matmul_bias_act(x.reshape(N * H * W, 3).astype(jnp.bfloat16),
                        adapter["w"], adapter["b"], act=True)
    return y.reshape(N, H, W, cout_p)


def avg_pool2x2_jnp(x):
    # glue: only used by the progressive-growing alpha-blend skip path
    N, H, W, C = x.shape
    return x.reshape(N, H // 2, 2, W // 2, 2, C).mean(axis=(2, 4))


def discriminator_forward(params, x, alpha=-1.0):
    """x: NHWC (N, resolution, resolution, 3). Returns squeezed logits (f32)."""
    step = params["step"]
    h = adapter_forward(x, params["adapters"][step])
    for i in range(step, N_LAYERS):
        h = downsample_resblock(h, params["blocks"][i])
        if i == step and 0.0 <= alpha < 1.0:
            skip = adapter_forward(avg_pool2x2_jnp(x), params["adapters"][step + 1])
            h = ((1.0 - alpha) * skip.astype(jnp.float32)
                 + alpha * h.astype(jnp.float32)).astype(jnp.bfloat16)
    # output_layer: Conv2d(400, 1, kernel_size=2) on the final 2x2 map.
    # 1-wide output => plain jnp matvec (Pallas here is pure launch overhead).
    N = h.shape[0]
    hf = h[:, :, :, :400].astype(jnp.float32).reshape(N, 2 * 2 * 400)
    out = hf @ params["out_w"] + params["out_b"]
    return jnp.squeeze(out)


# ----------------------------------------------------------------------------
# Deterministic parameter init (PyTorch-style uniform fan-in bounds) + prep
# into the kernel layout (channel-padded to 128 multiples, bf16 weights).
# ----------------------------------------------------------------------------
def _conv_init(key, kh, kw, cin, cout):
    k1, k2 = jax.random.split(key)
    bound = 1.0 / np.sqrt(kh * kw * cin)
    w = jax.random.uniform(k1, (kh, kw, cin, cout), jnp.float32, -bound, bound)
    b = jax.random.uniform(k2, (cout,), jnp.float32, -bound, bound)
    return w, b


def _prep_coordconv(w, b, cin, cout):
    """Raw CoordConv weight (3,3,cin+2,cout) -> padded per-dj slabs + coord weights."""
    cin_p, cout_p = _pad128(cin), _pad128(cout)
    wd = jnp.zeros((3, 3, cin_p, cout_p), jnp.float32)
    wd = wd.at[:, :, :cin, :cout].set(w[:, :, :cin, :])
    # rows ordered (di, cin_p) to match the in-kernel lane concat of 3 halo rows
    w_stack = jnp.transpose(wd, (1, 0, 2, 3)).reshape(3, 3 * cin_p, cout_p)
    wxx = jnp.zeros((3, 3, cout_p), jnp.float32).at[:, :, :cout].set(w[:, :, cin, :])
    wyy = jnp.zeros((3, 3, cout_p), jnp.float32).at[:, :, :cout].set(w[:, :, cin + 1, :])
    bp = jnp.zeros((cout_p,), jnp.float32).at[:cout].set(b)
    return {"w": w_stack.astype(jnp.bfloat16), "wxx": wxx, "wyy": wyy, "b": bp}


def init_discriminator(key, resolution):
    step = N_LAYERS - int(np.log2(resolution)) + 1
    keys = iter(jax.random.split(key, 64))

    adapters = {}
    for s in range(step, min(step + 2, N_LAYERS)):  # adapters reachable from `step`
        cout = ADAPTER_OUT[s]
        cout_p = _pad128(cout)
        w, b = _conv_init(next(keys), 1, 1, 3, cout)
        wp = jnp.zeros((3, cout_p), jnp.float32).at[:, :cout].set(w.reshape(3, cout))
        bp = jnp.zeros((cout_p,), jnp.float32).at[:cout].set(b)
        adapters[s] = {"w": wp.astype(jnp.bfloat16), "b": bp}

    blocks = {}
    for i in range(step, N_LAYERS):
        cin, cout = BLOCK_DIMS[i]
        cin_p, cout_p = _pad128(cin), _pad128(cout)
        rw, rb = _conv_init(next(keys), 1, 1, cin, cout)
        c1w, c1b = _conv_init(next(keys), 3, 3, cin + 2, cout)   # CoordConv (+2 coords)
        c2w, c2b = _conv_init(next(keys), 3, 3, cout + 2, cout)  # CoordConv (+2 coords)
        res_w = jnp.zeros((cin_p, cout_p), jnp.float32).at[:cin, :cout].set(
            rw.reshape(cin, cout))
        res_b = jnp.zeros((cout_p,), jnp.float32).at[:cout].set(rb)
        blocks[i] = {
            "res_w": res_w.astype(jnp.bfloat16),
            "res_b": res_b,
            "conv1": _prep_coordconv(c1w, c1b, cin, cout),
            "conv2": _prep_coordconv(c2w, c2b, cout, cout),
            "cout_p": cout_p,
        }

    ow, ob = _conv_init(next(keys), 2, 2, 400, 1)
    return {"step": step, "adapters": adapters, "blocks": blocks,
            "out_w": ow.reshape(2 * 2 * 400, 1), "out_b": ob}


# ----------------------------------------------------------------------------
if __name__ == "__main__":
    key = jax.random.PRNGKey(0)
    kx, kp = jax.random.split(key)

    resolution = 8  # -> step = 3: adapter[3], blocks 3 & 4, then 2x2 output conv
    batch = 2
    # NHWC input, equivalent to PyTorch NCHW (2, 3, 8, 8)
    x = jax.random.normal(kx, (batch, resolution, resolution, 3), jnp.float32)

    params = init_discriminator(kp, resolution)
    out = discriminator_forward(params, x, alpha=-1.0)
    out = jax.block_until_ready(out)

    assert out.shape == (batch,), out.shape
    assert bool(jnp.all(jnp.isfinite(out)))
    print("KERNEL_OK")
</pallas_src>

<mosaic_0001>
module attributes {stable_mosaic.version = 11 : i64} {
  func.func @_matmul_bias_act_kernel(%arg0: i32, %arg1: memref<128x3xbf16, #tpu.memory_space<vmem>>, %arg2: memref<3x512xbf16, #tpu.memory_space<vmem>>, %arg3: memref<1x512xf32, #tpu.memory_space<vmem>>, %arg4: memref<128x512xbf16, #tpu.memory_space<vmem>>) attributes {dimension_semantics = [#tpu.dimension_semantics<parallel>], iteration_bounds = array<i64: 1>, scalar_prefetch = 0 : i64, scratch_operands = 0 : i64, tpu.core_type = #tpu.core_type<tc>, window_params = [{transform_indices = @transform_0, window_bounds = array<i64: 128, 3>}, {pipeline_mode = #tpu.pipeline_mode<synchronous>, transform_indices = @transform_1, window_bounds = array<i64: 3, 512>}, {pipeline_mode = #tpu.pipeline_mode<synchronous>, transform_indices = @transform_2, window_bounds = array<i64: 1, 512>}, {transform_indices = @transform_3, window_bounds = array<i64: 128, 512>}]} {
    %c0 = arith.constant 0 : index
    %c0_0 = arith.constant 0 : index
    %0 = vector.load %arg1[%c0, %c0_0] : memref<128x3xbf16, #tpu.memory_space<vmem>>, vector<128x3xbf16>
    %c0_1 = arith.constant 0 : index
    %c0_2 = arith.constant 0 : index
    %1 = vector.load %arg2[%c0_1, %c0_2] : memref<3x512xbf16, #tpu.memory_space<vmem>>, vector<3x512xbf16>
    %cst = arith.constant dense<0.000000e+00> : vector<128x512xf32>
    %2 = tpu.matmul %0, %1, %cst {dimension_numbers = #tpu.dot_dimension_numbers<[1], [0], [0], [1], [0, 0, 1, 1], [], []>} : vector<128x3xbf16>, vector<3x512xbf16>, vector<128x512xf32> -> vector<128x512xf32>
    %c0_3 = arith.constant 0 : index
    %c0_4 = arith.constant 0 : index
    %3 = vector.load %arg3[%c0_3, %c0_4] : memref<1x512xf32, #tpu.memory_space<vmem>>, vector<1x512xf32>
    %4 = vector.broadcast %3 : vector<1x512xf32> to vector<128x512xf32>
    %5 = arith.addf %2, %4 : vector<128x512xf32>
    %cst_5 = arith.constant 0.000000e+00 : f32
    %6 = vector.broadcast %cst_5 : f32 to vector<128x512xf32>
    %7 = arith.cmpf ogt, %5, %6 : vector<128x512xf32>
    %cst_6 = arith.constant 2.000000e-01 : f32
    %8 = vector.broadcast %cst_6 : f32 to vector<128x512xf32>
    %9 = arith.mulf %8, %5 : vector<128x512xf32>
    %10 = arith.select %7, %5, %9 : vector<128x512xi1>, vector<128x512xf32>
    %11 = arith.truncf %10 : vector<128x512xf32> to vector<128x512xbf16>
    %c0_7 = arith.constant 0 : index
    %c0_8 = arith.constant 0 : index
    %12 = vector.load %arg4[%c0_7, %c0_8] : memref<128x512xbf16, #tpu.memory_space<vmem>>, vector<128x512xbf16>
    tpu.vector_store %arg4[%c0_7, %c0_8], %11 {strides = array<i32>} : memref<128x512xbf16, #tpu.memory_space<vmem>>, vector<128x512xbf16>,
    return
  }
  func.func @transform_0(%arg0: i32) -> (i32, i32) {
    %c0_i32 = arith.constant 0 : i32
    %c0_i32_0 = arith.constant 0 : i32
    return %arg0, %c0_i32 : i32, i32
  }
  func.func @transform_1(%arg0: i32) -> (i32, i32) {
    %c0_i32 = arith.constant 0 : i32
    %c0_i32_0 = arith.constant 0 : i32
    %c0_i32_1 = arith.constant 0 : i32
    return %c0_i32, %c0_i32_0 : i32, i32
  }
  func.func @transform_2(%arg0: i32) -> (i32, i32) {
    %c0_i32 = arith.constant 0 : i32
    %c0_i32_0 = arith.constant 0 : i32
    %c0_i32_1 = arith.constant 0 : i32
    return %c0_i32, %c0_i32_0 : i32, i32
  }
  func.func @transform_3(%arg0: i32) -> (i32, i32) {
    %c0_i32 = arith.constant 0 : i32
    %c0_i32_0 = arith.constant 0 : i32
    return %arg0, %c0_i32 : i32, i32
  }
}

</mosaic_0001>

<llo_original>
// kernel: tpu_custom_call.1
$region0: #{tpu_custom_call.1}
  #allocation0 [shape = 'u32[]', space=smem, size = 0x4, offset = 0x4, fixed_abs, tag = 'smem constant byte address 0x4 - core index']
  #allocation1 [shape = 'u32[72,128]{1,0:T(1,128)}', space=vmem, size = 0x9000, scoped, tag = 'internal scratch']
  %s0 = inlined_call_operand.vmem [shape: bf16[128,3], index: 0, kind: input, shape index: {}]
  %s1 = inlined_call_operand.vmem [shape: bf16[3,512], index: 1, kind: input, shape index: {}]
  %s2 = inlined_call_operand.vmem [shape: f32[1,512], index: 2, kind: input, shape index: {}]
  %s3 = inlined_call_operand.hbm [shape: bf16[128,512], index: 3, kind: output, shape index: {}]
  %s4 = sld [smem:[#allocation0]]
  $region22: #{tpu_custom_call.1} parent=0
    _
  %s6 = ssub.s32 1, %s4
  %s7 = scalar_select 0, %s6, %s4
  $region1: #{tpu_custom_call.1} parent=0
    #allocation2 [shape = 'u8[131072]{0}', space=vmem, size = 0x20000, scoped, tag = 'output window, operand 0, single buffered']
    #allocation3 [shape = 's32[1]{0}', space=sflag, size = 0x4, scoped, tag = 'scoped memory for tpu_custom_call.1']
    %8 = vsyncpa [#allocation3], 0
    // Predicated region
    $region2: #{tpu_custom_call.1} parent=1 // pred_check
      _
    $region3: #{tpu_custom_call.1} parent=1 // pred_check_branch
      %10 = sbr.rel (0) target = $region5
    $region4: #{tpu_custom_call.1} parent=1 // pred_region
      _
    $region5: #{tpu_custom_call.1} parent=1 // pred_fallthru
      _
    // Predicated region
    $region6: #{tpu_custom_call.1} parent=1 // pred_check
      _
    $region7: #{tpu_custom_call.1} parent=1 // pred_check_branch
      %12 = sbr.rel (0) target = $region9
    $region8: #{tpu_custom_call.1} parent=1 // pred_region
      _
    $region9: #{tpu_custom_call.1} parent=1 // pred_fallthru
      _
    // Predicated region
    $region10: #{tpu_custom_call.1} parent=1 // pred_check
      _
    $region11: #{tpu_custom_call.1} parent=1 // pred_check_branch
      %14 = sbr.rel (0) target = $region13
    $region12: #{tpu_custom_call.1} parent=1 // pred_region
      _
    $region13: #{tpu_custom_call.1} parent=1 // pred_fallthru
      _
    %v16 = vld [vmem:[%s0] sm:$0xf]
    %v17 = vld [vmem:[%s0 + $0x4] sm:$0xf]
    %v18 = vld [vmem:[%s0 + $0x8] sm:$0xf]
    %v19 = vld [vmem:[%s0 + $0xc] sm:$0xf]
    %v20 = vld [vmem:[%s0 + $0x10] sm:$0xf]
    %v21 = vld [vmem:[%s0 + $0x14] sm:$0xf]
    %v22 = vld [vmem:[%s0 + $0x18] sm:$0xf]
    %v23 = vld [vmem:[%s0 + $0x1c] sm:$0xf]
    %v24 = vld [vmem:[%s0 + $0x20] sm:$0xf]
    %v25 = vld [vmem:[%s0 + $0x24] sm:$0xf]
    %v26 = vld [vmem:[%s0 + $0x28] sm:$0xf]
    %v27 = vld [vmem:[%s0 + $0x2c] sm:$0xf]
    %v28 = vld [vmem:[%s0 + $0x30] sm:$0xf]
    %v29 = vld [vmem:[%s0 + $0x34] sm:$0xf]
    %v30 = vld [vmem:[%s0 + $0x38] sm:$0xf]
    %v31 = vld [vmem:[%s0 + $0x3c] sm:$0xf]
    %v32 = vld [vmem:[%s1] sm:$0xff]
    %v33 = vld [vmem:[%s2] sm:$0xf]
    %v35 = vperm.slane %v33, 0
    %v36 = vperm.slane %v33, 1
    %v37 = vperm.slane %v33, 2
    %v38 = vperm.slane %v33, 3
    %v59 = vunpack.c.l.b16 %v16
    %v60 = vunpack.c.l.b16 %v17
    %v61 = vunpack.c.l.b16 %v18
    %v62 = vunpack.c.l.b16 %v19
    %v63 = vunpack.c.l.b16 %v20
    %v64 = vunpack.c.l.b16 %v21
    %v65 = vunpack.c.l.b16 %v22
    %v66 = vunpack.c.l.b16 %v23
    %v67 = vunpack.c.l.b16 %v24
    %v68 = vunpack.c.l.b16 %v25
    %v69 = vunpack.c.l.b16 %v26
    %v70 = vunpack.c.l.b16 %v27
    %v71 = vunpack.c.l.b16 %v28
    %v72 = vunpack.c.l.b16 %v29
    %v73 = vunpack.c.l.b16 %v30
    %v74 = vunpack.c.l.b16 %v31
    %v75 = vpack.c.b16 %v60, %v59
    %v76 = vpack.c.b16 %v62, %v61
    %v77 = vpack.c.b16 %v64, %v63
    %v78 = vpack.c.b16 %v66, %v65
    %v79 = vpack.c.b16 %v68, %v67
    %v80 = vpack.c.b16 %v70, %v69
    %v81 = vpack.c.b16 %v72, %v71
    %v82 = vpack.c.b16 %v74, %v73
    %84 = vst [vmem:[#allocation1] ss:$4 sm:$0xff] %v32
    %v85 = vld.sshfl [vmem:[#allocation1] sm:$0xff pattern:$0x73625140]
    %v86 = vld.sshfl [vmem:[#allocation1 + $0x8] sm:$0xff pattern:$0x73625140]
    %v87 = vld.sshfl [vmem:[#allocation1 + $0x10] sm:$0xff pattern:$0x73625140]
    %v88 = vld.sshfl [vmem:[#allocation1 + $0x18] sm:$0xff pattern:$0x73625140]
    %vm89 = vcmask 23552
    %v91 = vsel %vm89, %v75, 0
    %v94 = vsel %vm89, %v76, 0
    %v97 = vsel %vm89, %v77, 0
    %v100 = vsel %vm89, %v78, 0
    %v103 = vsel %vm89, %v79, 0
    %v106 = vsel %vm89, %v80, 0
    %v109 = vsel %vm89, %v81, 0
    %v112 = vsel %vm89, %v82, 0
    %vm114 = vcmask 1040384
    %vm115 = vcmask 1041408
    %v116 = vsel %vm114, 4294967295, 65535
    %v117 = vsel %vm115, %v116, 0
    %v118 = vand.u32 %v85, %v117
    %v120 = vand.u32 %v86, %v117
    %v122 = vand.u32 %v87, %v117
    %v124 = vand.u32 %v88, %v117
    %126 = vmatpush.bf16.msra.mxu0 0
    %127 = vmatpush.bf16.msra.mxu0 0
    %128 = vmatpush.bf16.msra.mxu0 0
    %129 = vmatpush.bf16.msra.mxu0 0
    %130 = vmatpush.bf16.msra.mxu0 0
    %131 = vmatpush.bf16.msra.mxu0 0
    %132 = vmatpush.bf16.msra.mxu0 0
    %133 = vmatpush.bf16.msra.mxu0 %v118
    %134 = vmatmul.bf16.gmra.mxu0 %v91
    %v135 = vpop.f32.mrf.mxu0
    %v136 = vadd.f32 %v35, %v135
    %v137 = vpop.f32.mrf.mxu0
    %v138 = vadd.f32 %v35, %v137
    %139 = vmatmul.bf16.gmra.mxu0 %v94
    %v140 = vpop.f32.mrf.mxu0
    %v141 = vadd.f32 %v35, %v140
    %v142 = vpop.f32.mrf.mxu0
    %v143 = vadd.f32 %v35, %v142
    %144 = vmatmul.bf16.gmra.mxu0 %v97
    %v145 = vpop.f32.mrf.mxu0
    %v146 = vadd.f32 %v35, %v145
    %v147 = vpop.f32.mrf.mxu0
    %v148 = vadd.f32 %v35, %v147
    %149 = vmatmul.bf16.gmra.mxu0 %v100
    %v150 = vpop.f32.mrf.mxu0
    %v151 = vadd.f32 %v35, %v150
    %v152 = vpop.f32.mrf.mxu0
    %v153 = vadd.f32 %v35, %v152
    %154 = vmatmul.bf16.gmra.mxu0 %v103
    %v155 = vpop.f32.mrf.mxu0
    %v156 = vadd.f32 %v35, %v155
    %v157 = vpop.f32.mrf.mxu0
    %v158 = vadd.f32 %v35, %v157
    %159 = vmatmul.bf16.gmra.mxu0 %v106
    %v160 = vpop.f32.mrf.mxu0
    %v161 = vadd.f32 %v35, %v160
    %v162 = vpop.f32.mrf.mxu0
    %v163 = vadd.f32 %v35, %v162
    %164 = vmatmul.bf16.gmra.mxu0 %v109
    %v165 = vpop.f32.mrf.mxu0
    %v166 = vadd.f32 %v35, %v165
    %v167 = vpop.f32.mrf.mxu0
    %v168 = vadd.f32 %v35, %v167
    %169 = vmatmul.bf16.gmra.mxu0 %v112
    %v170 = vpop.f32.mrf.mxu0
    %v171 = vadd.f32 %v35, %v170
    %v172 = vpop.f32.mrf.mxu0
    %v173 = vadd.f32 %v35, %v172
    %174 = vdwg.mxu0
    %175 = vmatpush.bf16.msra.mxu0 0
    %176 = vmatpush.bf16.msra.mxu0 0
    %177 = vmatpush.bf16.msra.mxu0 0
    %178 = vmatpush.bf16.msra.mxu0 0
    %179 = vmatpush.bf16.msra.mxu0 0
    %180 = vmatpush.bf16.msra.mxu0 0
    %181 = vmatpush.bf16.msra.mxu0 0
    %182 = vmatpush.bf16.msra.mxu0 %v120
    %183 = vmatmul.bf16.gmra.mxu0 %v91
    %v184 = vpop.f32.mrf.mxu0
    %v185 = vadd.f32 %v36, %v184
    %v186 = vpop.f32.mrf.mxu0
    %v187 = vadd.f32 %v36, %v186
    %188 = vmatmul.bf16.gmra.mxu0 %v94
    %v189 = vpop.f32.mrf.mxu0
    %v190 = vadd.f32 %v36, %v189
    %v191 = vpop.f32.mrf.mxu0
    %v192 = vadd.f32 %v36, %v191
    %193 = vmatmul.bf16.gmra.mxu0 %v97
    %v194 = vpop.f32.mrf.mxu0
    %v195 = vadd.f32 %v36, %v194
    %v196 = vpop.f32.mrf.mxu0
    %v197 = vadd.f32 %v36, %v196
    %198 = vmatmul.bf16.gmra.mxu0 %v100
    %v199 = vpop.f32.mrf.mxu0
    %v200 = vadd.f32 %v36, %v199
    %v201 = vpop.f32.mrf.mxu0
    %v202 = vadd.f32 %v36, %v201
    %203 = vmatmul.bf16.gmra.mxu0 %v103
    %v204 = vpop.f32.mrf.mxu0
    %v205 = vadd.f32 %v36, %v204
    %v206 = vpop.f32.mrf.mxu0
    %v207 = vadd.f32 %v36, %v206
    %208 = vmatmul.bf16.gmra.mxu0 %v106
    %v209 = vpop.f32.mrf.mxu0
    %v210 = vadd.f32 %v36, %v209
    %v211 = vpop.f32.mrf.mxu0
    %v212 = vadd.f32 %v36, %v211
    %213 = vmatmul.bf16.gmra.mxu0 %v109
    %v214 = vpop.f32.mrf.mxu0
    %v215 = vadd.f32 %v36, %v214
    %v216 = vpop.f32.mrf.mxu0
    %v217 = vadd.f32 %v36, %v216
    %218 = vmatmul.bf16.gmra.mxu0 %v112
    %v219 = vpop.f32.mrf.mxu0
    %v220 = vadd.f32 %v36, %v219
    %v221 = vpop.f32.mrf.mxu0
    %v222 = vadd.f32 %v36, %v221
    %223 = vdwg.mxu0
    %224 = vmatpush.bf16.msra.mxu0 0
    %225 = vmatpush.bf16.msra.mxu0 0
    %226 = vmatpush.bf16.msra.mxu0 0
    %227 = vmatpush.bf16.msra.mxu0 0
    %228 = vmatpush.bf16.msra.mxu0 0
    %229 = vmatpush.bf16.msra.mxu0 0
    %230 = vmatpush.bf16.msra.mxu0 0
    %231 = vmatpush.bf16.msra.mxu0 %v122
    %232 = vmatmul.bf16.gmra.mxu0 %v91
    %v233 = vpop.f32.mrf.mxu0
    %v234 = vadd.f32 %v37, %v233
    %v235 = vpop.f32.mrf.mxu0
    %v236 = vadd.f32 %v37, %v235
    %237 = vmatmul.bf16.gmra.mxu0 %v94
    %v238 = vpop.f32.mrf.mxu0
    %v239 = vadd.f32 %v37, %v238
    %v240 = vpop.f32.mrf.mxu0
    %v241 = vadd.f32 %v37, %v240
    %242 = vmatmul.bf16.gmra.mxu0 %v97
    %v243 = vpop.f32.mrf.mxu0
    %v244 = vadd.f32 %v37, %v243
    %v245 = vpop.f32.mrf.mxu0
    %v246 = vadd.f32 %v37, %v245
    %247 = vmatmul.bf16.gmra.mxu0 %v100
    %v248 = vpop.f32.mrf.mxu0
    %v249 = vadd.f32 %v37, %v248
    %v250 = vpop.f32.mrf.mxu0
    %v251 = vadd.f32 %v37, %v250
    %252 = vmatmul.bf16.gmra.mxu0 %v103
    %v253 = vpop.f32.mrf.mxu0
    %v254 = vadd.f32 %v37, %v253
    %v255 = vpop.f32.mrf.mxu0
    %v256 = vadd.f32 %v37, %v255
    %257 = vmatmul.bf16.gmra.mxu0 %v106
    %v258 = vpop.f32.mrf.mxu0
    %v259 = vadd.f32 %v37, %v258
    %v260 = vpop.f32.mrf.mxu0
    %v261 = vadd.f32 %v37, %v260
    %262 = vmatmul.bf16.gmra.mxu0 %v109
    %v263 = vpop.f32.mrf.mxu0
    %v264 = vadd.f32 %v37, %v263
    %v265 = vpop.f32.mrf.mxu0
    %v266 = vadd.f32 %v37, %v265
    %267 = vmatmul.bf16.gmra.mxu0 %v112
    %v268 = vpop.f32.mrf.mxu0
    %v269 = vadd.f32 %v37, %v268
    %v270 = vpop.f32.mrf.mxu0
    %v271 = vadd.f32 %v37, %v270
    %272 = vdwg.mxu0
    %273 = vmatpush.bf16.msra.mxu0 0
    %274 = vmatpush.bf16.msra.mxu0 0
    %275 = vmatpush.bf16.msra.mxu0 0
    %276 = vmatpush.bf16.msra.mxu0 0
    %277 = vmatpush.bf16.msra.mxu0 0
    %278 = vmatpush.bf16.msra.mxu0 0
    %279 = vmatpush.bf16.msra.mxu0 0
    %280 = vmatpush.bf16.msra.mxu0 %v124
    %281 = vmatmul.bf16.gmra.mxu0 %v91
    %v282 = vpop.f32.mrf.mxu0
    %v283 = vadd.f32 %v38, %v282
    %v284 = vpop.f32.mrf.mxu0
    %v285 = vadd.f32 %v38, %v284
    %286 = vmatmul.bf16.gmra.mxu0 %v94
    %v287 = vpop.f32.mrf.mxu0
    %v288 = vadd.f32 %v38, %v287
    %v289 = vpop.f32.mrf.mxu0
    %v290 = vadd.f32 %v38, %v289
    %291 = vmatmul.bf16.gmra.mxu0 %v97
    %v292 = vpop.f32.mrf.mxu0
    %v293 = vadd.f32 %v38, %v292
    %v294 = vpop.f32.mrf.mxu0
    %v295 = vadd.f32 %v38, %v294
    %296 = vmatmul.bf16.gmra.mxu0 %v100
    %v297 = vpop.f32.mrf.mxu0
    %v298 = vadd.f32 %v38, %v297
    %v299 = vpop.f32.mrf.mxu0
    %v300 = vadd.f32 %v38, %v299
    %301 = vmatmul.bf16.gmra.mxu0 %v103
    %v302 = vpop.f32.mrf.mxu0
    %v303 = vadd.f32 %v38, %v302
    %v304 = vpop.f32.mrf.mxu0
    %v305 = vadd.f32 %v38, %v304
    %306 = vmatmul.bf16.gmra.mxu0 %v106
    %v307 = vpop.f32.mrf.mxu0
    %v308 = vadd.f32 %v38, %v307
    %v309 = vpop.f32.mrf.mxu0
    %v310 = vadd.f32 %v38, %v309
    %311 = vmatmul.bf16.gmra.mxu0 %v109
    %v312 = vpop.f32.mrf.mxu0
    %v313 = vadd.f32 %v38, %v312
    %v314 = vpop.f32.mrf.mxu0
    %v315 = vadd.f32 %v38, %v314
    %316 = vmatmul.bf16.gmra.mxu0 %v112
    %v317 = vpop.f32.mrf.mxu0
    %v318 = vadd.f32 %v38, %v317
    %v319 = vpop.f32.mrf.mxu0
    %v320 = vadd.f32 %v38, %v319
    %321 = vdwg.mxu0
    %vm322 = vcmp.gt.f32.partialorder %v136, 0.0
    %vm323 = vcmp.gt.f32.partialorder %v185, 0.0
    %vm324 = vcmp.gt.f32.partialorder %v234, 0.0
    %vm325 = vcmp.gt.f32.partialorder %v283, 0.0
    %vm326 = vcmp.gt.f32.partialorder %v138, 0.0
    %vm327 = vcmp.gt.f32.partialorder %v187, 0.0
    %vm328 = vcmp.gt.f32.partialorder %v236, 0.0
    %vm329 = vcmp.gt.f32.partialorder %v285, 0.0
    %vm330 = vcmp.gt.f32.partialorder %v141, 0.0
    %vm331 = vcmp.gt.f32.partialorder %v190, 0.0
    %vm332 = vcmp.gt.f32.partialorder %v239, 0.0
    %vm333 = vcmp.gt.f32.partialorder %v288, 0.0
    %vm334 = vcmp.gt.f32.partialorder %v143, 0.0
    %vm335 = vcmp.gt.f32.partialorder %v192, 0.0
    %vm336 = vcmp.gt.f32.partialorder %v241, 0.0
    %vm337 = vcmp.gt.f32.partialorder %v290, 0.0
    %vm338 = vcmp.gt.f32.partialorder %v146, 0.0
    %vm339 = vcmp.gt.f32.partialorder %v195, 0.0
    %vm340 = vcmp.gt.f32.partialorder %v244, 0.0
    %vm341 = vcmp.gt.f32.partialorder %v293, 0.0
    %vm342 = vcmp.gt.f32.partialorder %v148, 0.0
    %vm343 = vcmp.gt.f32.partialorder %v197, 0.0
    %vm344 = vcmp.gt.f32.partialorder %v246, 0.0
    %vm345 = vcmp.gt.f32.partialorder %v295, 0.0
    %vm346 = vcmp.gt.f32.partialorder %v151, 0.0
    %vm347 = vcmp.gt.f32.partialorder %v200, 0.0
    %vm348 = vcmp.gt.f32.partialorder %v249, 0.0
    %vm349 = vcmp.gt.f32.partialorder %v298, 0.0
    %vm350 = vcmp.gt.f32.partialorder %v153, 0.0
    %vm351 = vcmp.gt.f32.partialorder %v202, 0.0
    %vm352 = vcmp.gt.f32.partialorder %v251, 0.0
    %vm353 = vcmp.gt.f32.partialorder %v300, 0.0
    %vm354 = vcmp.gt.f32.partialorder %v156, 0.0
    %vm355 = vcmp.gt.f32.partialorder %v205, 0.0
    %vm356 = vcmp.gt.f32.partialorder %v254, 0.0
    %vm357 = vcmp.gt.f32.partialorder %v303, 0.0
    %vm358 = vcmp.gt.f32.partialorder %v158, 0.0
    %vm359 = vcmp.gt.f32.partialorder %v207, 0.0
    %vm360 = vcmp.gt.f32.partialorder %v256, 0.0
    %vm361 = vcmp.gt.f32.partialorder %v305, 0.0
    %vm362 = vcmp.gt.f32.partialorder %v161, 0.0
    %vm363 = vcmp.gt.f32.partialorder %v210, 0.0
    %vm364 = vcmp.gt.f32.partialorder %v259, 0.0
    %vm365 = vcmp.gt.f32.partialorder %v308, 0.0
    %vm366 = vcmp.gt.f32.partialorder %v163, 0.0
    %vm367 = vcmp.gt.f32.partialorder %v212, 0.0
    %vm368 = vcmp.gt.f32.partialorder %v261, 0.0
    %vm369 = vcmp.gt.f32.partialorder %v310, 0.0
    %vm370 = vcmp.gt.f32.partialorder %v166, 0.0
    %vm371 = vcmp.gt.f32.partialorder %v215, 0.0
    %vm372 = vcmp.gt.f32.partialorder %v264, 0.0
    %vm373 = vcmp.gt.f32.partialorder %v313, 0.0
    %vm374 = vcmp.gt.f32.partialorder %v168, 0.0
    %vm375 = vcmp.gt.f32.partialorder %v217, 0.0
    %vm376 = vcmp.gt.f32.partialorder %v266, 0.0
    %vm377 = vcmp.gt.f32.partialorder %v315, 0.0
    %vm378 = vcmp.gt.f32.partialorder %v171, 0.0
    %vm379 = vcmp.gt.f32.partialorder %v220, 0.0
    %vm380 = vcmp.gt.f32.partialorder %v269, 0.0
    %vm381 = vcmp.gt.f32.partialorder %v318, 0.0
    %vm382 = vcmp.gt.f32.partialorder %v173, 0.0
    %vm383 = vcmp.gt.f32.partialorder %v222, 0.0
    %vm384 = vcmp.gt.f32.partialorder %v271, 0.0
    %vm385 = vcmp.gt.f32.partialorder %v320, 0.0
    %v386 = vmul.f32 %v136, 0.2
    %v387 = vmul.f32 %v185, 0.2
    %v388 = vmul.f32 %v234, 0.2
    %v389 = vmul.f32 %v283, 0.2
    %v390 = vmul.f32 %v138, 0.2
    %v391 = vmul.f32 %v187, 0.2
    %v392 = vmul.f32 %v236, 0.2
    %v393 = vmul.f32 %v285, 0.2
    %v394 = vmul.f32 %v141, 0.2
    %v395 = vmul.f32 %v190, 0.2
    %v396 = vmul.f32 %v239, 0.2
    %v397 = vmul.f32 %v288, 0.2
    %v398 = vmul.f32 %v143, 0.2
    %v399 = vmul.f32 %v192, 0.2
    %v400 = vmul.f32 %v241, 0.2
    %v401 = vmul.f32 %v290, 0.2
    %v402 = vmul.f32 %v146, 0.2
    %v403 = vmul.f32 %v195, 0.2
    %v404 = vmul.f32 %v244, 0.2
    %v405 = vmul.f32 %v293, 0.2
    %v406 = vmul.f32 %v148, 0.2
    %v407 = vmul.f32 %v197, 0.2
    %v408 = vmul.f32 %v246, 0.2
    %v409 = vmul.f32 %v295, 0.2
    %v410 = vmul.f32 %v151, 0.2
    %v411 = vmul.f32 %v200, 0.2
    %v412 = vmul.f32 %v249, 0.2
    %v413 = vmul.f32 %v298, 0.2
    %v414 = vmul.f32 %v153, 0.2
    %v415 = vmul.f32 %v202, 0.2
    %v416 = vmul.f32 %v251, 0.2
    %v417 = vmul.f32 %v300, 0.2
    %v418 = vmul.f32 %v156, 0.2
    %v419 = vmul.f32 %v205, 0.2
    %v420 = vmul.f32 %v254, 0.2
    %v421 = vmul.f32 %v303, 0.2
    %v422 = vmul.f32 %v158, 0.2
    %v423 = vmul.f32 %v207, 0.2
    %v424 = vmul.f32 %v256, 0.2
    %v425 = vmul.f32 %v305, 0.2
    %v426 = vmul.f32 %v161, 0.2
    %v427 = vmul.f32 %v210, 0.2
    %v428 = vmul.f32 %v259, 0.2
    %v429 = vmul.f32 %v308, 0.2
    %v430 = vmul.f32 %v163, 0.2
    %v431 = vmul.f32 %v212, 0.2
    %v432 = vmul.f32 %v261, 0.2
    %v433 = vmul.f32 %v310, 0.2
    %v434 = vmul.f32 %v166, 0.2
    %v435 = vmul.f32 %v215, 0.2
    %v436 = vmul.f32 %v264, 0.2
    %v437 = vmul.f32 %v313, 0.2
    %v438 = vmul.f32 %v168, 0.2
    %v439 = vmul.f32 %v217, 0.2
    %v440 = vmul.f32 %v266, 0.2
    %v441 = vmul.f32 %v315, 0.2
    %v442 = vmul.f32 %v171, 0.2
    %v443 = vmul.f32 %v220, 0.2
    %v444 = vmul.f32 %v269, 0.2
    %v445 = vmul.f32 %v318, 0.2
    %v446 = vmul.f32 %v173, 0.2
    %v447 = vmul.f32 %v222, 0.2
    %v448 = vmul.f32 %v271, 0.2
    %v449 = vmul.f32 %v320, 0.2
    %v450 = vsel %vm322, %v136, %v386
    %v451 = vsel %vm323, %v185, %v387
    %v452 = vsel %vm324, %v234, %v388
    %v453 = vsel %vm325, %v283, %v389
    %v454 = vsel %vm326, %v138, %v390
    %v455 = vsel %vm327, %v187, %v391
    %v456 = vsel %vm328, %v236, %v392
    %v457 = vsel %vm329, %v285, %v393
    %v458 = vsel %vm330, %v141, %v394
    %v459 = vsel %vm331, %v190, %v395
    %v460 = vsel %vm332, %v239, %v396
    %v461 = vsel %vm333, %v288, %v397
    %v462 = vsel %vm334, %v143, %v398
    %v463 = vsel %vm335, %v192, %v399
    %v464 = vsel %vm336, %v241, %v400
    %v465 = vsel %vm337, %v290, %v401
    %v466 = vsel %vm338, %v146, %v402
    %v467 = vsel %vm339, %v195, %v403
    %v468 = vsel %vm340, %v244, %v404
    %v469 = vsel %vm341, %v293, %v405
    %v470 = vsel %vm342, %v148, %v406
    %v471 = vsel %vm343, %v197, %v407
    %v472 = vsel %vm344, %v246, %v408
    %v473 = vsel %vm345, %v295, %v409
    %v474 = vsel %vm346, %v151, %v410
    %v475 = vsel %vm347, %v200, %v411
    %v476 = vsel %vm348, %v249, %v412
    %v477 = vsel %vm349, %v298, %v413
    %v478 = vsel %vm350, %v153, %v414
    %v479 = vsel %vm351, %v202, %v415
    %v480 = vsel %vm352, %v251, %v416
    %v481 = vsel %vm353, %v300, %v417
    %v482 = vsel %vm354, %v156, %v418
    %v483 = vsel %vm355, %v205, %v419
    %v484 = vsel %vm356, %v254, %v420
    %v485 = vsel %vm357, %v303, %v421
    %v486 = vsel %vm358, %v158, %v422
    %v487 = vsel %vm359, %v207, %v423
    %v488 = vsel %vm360, %v256, %v424
    %v489 = vsel %vm361, %v305, %v425
    %v490 = vsel %vm362, %v161, %v426
    %v491 = vsel %vm363, %v210, %v427
    %v492 = vsel %vm364, %v259, %v428
    %v493 = vsel %vm365, %v308, %v429
    %v494 = vsel %vm366, %v163, %v430
    %v495 = vsel %vm367, %v212, %v431
    %v496 = vsel %vm368, %v261, %v432
    %v497 = vsel %vm369, %v310, %v433
    %v498 = vsel %vm370, %v166, %v434
    %v499 = vsel %vm371, %v215, %v435
    %v500 = vsel %vm372, %v264, %v436
    %v501 = vsel %vm373, %v313, %v437
    %v502 = vsel %vm374, %v168, %v438
    %v503 = vsel %vm375, %v217, %v439
    %v504 = vsel %vm376, %v266, %v440
    %v505 = vsel %vm377, %v315, %v441
    %v506 = vsel %vm378, %v171, %v442
    %v507 = vsel %vm379, %v220, %v443
    %v508 = vsel %vm380, %v269, %v444
    %v509 = vsel %vm381, %v318, %v445
    %v510 = vsel %vm382, %v173, %v446
    %v511 = vsel %vm383, %v222, %v447
    %v512 = vsel %vm384, %v271, %v448
    %v513 = vsel %vm385, %v320, %v449
    %v514 = vpack.c.bf16 %v451, %v450
    %v515 = vpack.c.bf16 %v453, %v452
    %v516 = vpack.c.bf16 %v455, %v454
    %v517 = vpack.c.bf16 %v457, %v456
    %v518 = vpack.c.bf16 %v459, %v458
    %v519 = vpack.c.bf16 %v461, %v460
    %v520 = vpack.c.bf16 %v463, %v462
    %v521 = vpack.c.bf16 %v465, %v464
    %v522 = vpack.c.bf16 %v467, %v466
    %v523 = vpack.c.bf16 %v469, %v468
    %v524 = vpack.c.bf16 %v471, %v470
    %v525 = vpack.c.bf16 %v473, %v472
    %v526 = vpack.c.bf16 %v475, %v474
    %v527 = vpack.c.bf16 %v477, %v476
    %v528 = vpack.c.bf16 %v479, %v478
    %v529 = vpack.c.bf16 %v481, %v480
    %v530 = vpack.c.bf16 %v483, %v482
    %v531 = vpack.c.bf16 %v485, %v484
    %v532 = vpack.c.bf16 %v487, %v486
    %v533 = vpack.c.bf16 %v489, %v488
    %v534 = vpack.c.bf16 %v491, %v490
    %v535 = vpack.c.bf16 %v493, %v492
    %v536 = vpack.c.bf16 %v495, %v494
    %v537 = vpack.c.bf16 %v497, %v496
    %v538 = vpack.c.bf16 %v499, %v498
    %v539 = vpack.c.bf16 %v501, %v500
    %v540 = vpack.c.bf16 %v503, %v502
    %v541 = vpack.c.bf16 %v505, %v504
    %v542 = vpack.c.bf16 %v507, %v506
    %v543 = vpack.c.bf16 %v509, %v508
    %v544 = vpack.c.bf16 %v511, %v510
    %v545 = vpack.c.bf16 %v513, %v512
    %546 = vst [vmem:[#allocation2] sm:$0xff] %v514
    %547 = vst [vmem:[#allocation2 + $0x8] sm:$0xff] %v515
    %548 = vst [vmem:[#allocation2 + $0x10] sm:$0xff] %v516
    %549 = vst [vmem:[#allocation2 + $0x18] sm:$0xff] %v517
    %550 = vst [vmem:[#allocation2 + $0x20] sm:$0xff] %v518
    %551 = vst [vmem:[#allocation2 + $0x28] sm:$0xff] %v519
    %552 = vst [vmem:[#allocation2 + $0x30] sm:$0xff] %v520
    %553 = vst [vmem:[#allocation2 + $0x38] sm:$0xff] %v521
    %554 = vst [vmem:[#allocation2 + $0x40] sm:$0xff] %v522
    %555 = vst [vmem:[#allocation2 + $0x48] sm:$0xff] %v523
    %556 = vst [vmem:[#allocation2 + $0x50] sm:$0xff] %v524
    %557 = vst [vmem:[#allocation2 + $0x58] sm:$0xff] %v525
    %558 = vst [vmem:[#allocation2 + $0x60] sm:$0xff] %v526
    %559 = vst [vmem:[#allocation2 + $0x68] sm:$0xff] %v527
    %560 = vst [vmem:[#allocation2 + $0x70] sm:$0xff] %v528
    %561 = vst [vmem:[#allocation2 + $0x78] sm:$0xff] %v529
    %562 = vst [vmem:[#allocation2 + $0x80] sm:$0xff] %v530
    %563 = vst [vmem:[#allocation2 + $0x88] sm:$0xff] %v531
    %564 = vst [vmem:[#allocation2 + $0x90] sm:$0xff] %v532
    %565 = vst [vmem:[#allocation2 + $0x98] sm:$0xff] %v533
    %566 = vst [vmem:[#allocation2 + $0xa0] sm:$0xff] %v534
    %567 = vst [vmem:[#allocation2 + $0xa8] sm:$0xff] %v535
    %568 = vst [vmem:[#allocation2 + $0xb0] sm:$0xff] %v536
    %569 = vst [vmem:[#allocation2 + $0xb8] sm:$0xff] %v537
    %570 = vst [vmem:[#allocation2 + $0xc0] sm:$0xff] %v538
    %571 = vst [vmem:[#allocation2 + $0xc8] sm:$0xff] %v539
    %572 = vst [vmem:[#allocation2 + $0xd0] sm:$0xff] %v540
    %573 = vst [vmem:[#allocation2 + $0xd8] sm:$0xff] %v541
    %574 = vst [vmem:[#allocation2 + $0xe0] sm:$0xff] %v542
    %575 = vst [vmem:[#allocation2 + $0xe8] sm:$0xff] %v543
    %576 = vst [vmem:[#allocation2 + $0xf0] sm:$0xff] %v544
    %577 = vst [vmem:[#allocation2 + $0xf8] sm:$0xff] %v545
    // Predicated region
    $region14: #{tpu_custom_call.1} parent=1 // pred_check
      _
    $region15: #{tpu_custom_call.1} parent=1 // pred_check_branch
      %579 = sbr.rel (0) target = $region17
    $region16: #{tpu_custom_call.1} parent=1 // pred_region
      %581 = vsyncadd [#allocation3], 0
      %s582 = sshll.u32 [#allocation2], 4
      %s583 = int_to_ptr.vmem [resolvable:$true] %s582
      %s584 = sshll.u32 %s3, 4
      %s585 = int_to_ptr.hbm [resolvable:$true] %s584
      %590 = dma.vmem_to_hbm [thread:$0]  %s583, 4096, %s585, [#allocation3], 256, 256, 16
    $region17: #{tpu_custom_call.1} parent=1 // pred_fallthru
      _
    // Predicated region
    $region18: #{tpu_custom_call.1} parent=1 // pred_check
      _
    $region19: #{tpu_custom_call.1} parent=1 // pred_check_branch
      %592 = sbr.rel (0) target = $region21
    $region20: #{tpu_custom_call.1} parent=1 // pred_region
      %594 = dma.done [#allocation3], 4096
    $region21: #{tpu_custom_call.1} parent=1 // pred_fallthru
      _
    %595 = vsyncpa [#allocation3], 1

</llo_original>
